<compile_context>
chip_gen: v5e
topology: v5e:2x2
jax: 0.10.0
libtpu: 0.0.40
codegen_flags: <defaults>
</compile_context>

<pallas_src>
import functools
import math

import jax
import jax.numpy as jnp
from jax import lax
from jax.experimental import pallas as pl
from jax.experimental.pallas import tpu as pltpu

_INV_SQRT2 = 0.7071067811865476
_SQRT_2_OVER_PI = 0.7978845608028654
_LN_EPS = 1e-5


def _round_up(n, m):
    return ((n + m - 1) // m) * m


def _head_transform_kernel(x_ref, w_ref, b_ref, g_ref, beta_ref, o_ref, *,
                           matmul_dtype, use_tanh_gelu):
    # x_ref: (tm, H) in the input dtype; w_ref: (H, H) = W^T in matmul dtype;
    # b_ref/g_ref/beta_ref: (1, H) f32; o_ref: (tm, H) in the input dtype.
    x = x_ref[...]
    if x.dtype != matmul_dtype:
        x = x.astype(matmul_dtype)        # cast in-kernel (no extra HBM pass)

    # Dense: x @ W^T + b on the MXU, f32 accumulation.
    if jnp.dtype(matmul_dtype) == jnp.dtype(jnp.float32):
        h = jnp.dot(x, w_ref[...], precision=lax.Precision.HIGHEST,
                    preferred_element_type=jnp.float32)
    else:
        h = jnp.dot(x, w_ref[...], preferred_element_type=jnp.float32)
    h = h + b_ref[...]

    if use_tanh_gelu:
        # Perf option: transcendental goes to the EUP slot; slightly different
        # numerics from torch's exact-erf gelu.
        h = (0.5 * h) * (1.0 + jnp.tanh(_SQRT_2_OVER_PI *
                                        (h + 0.044715 * h * h * h)))
    else:
        # Exact erf-GELU (matches the torch reference); multiply by 1/sqrt(2).
        h = (0.5 * h) * (1.0 + lax.erf(h * _INV_SQRT2))

    # Two-pass LayerNorm over the hidden width (same op count as the one-pass
    # E[h^2]-mean^2 form, better cancellation).
    inv_h = 1.0 / h.shape[-1]
    mean = jnp.sum(h, axis=-1, keepdims=True) * inv_h
    d = h - mean
    var = jnp.sum(d * d, axis=-1, keepdims=True) * inv_h
    y = d * lax.rsqrt(var + _LN_EPS) * g_ref[...] + beta_ref[...]

    o_ref[...] = y.astype(o_ref.dtype)


def cxr_flamingo_head_transform(x, weight, bias, gamma, beta, *,
                                tm=1024, matmul_dtype=jnp.bfloat16,
                                use_tanh_gelu=False,
                                vmem_budget_bytes=40 * 1024 * 1024):
    """x: (B, S, H); weight: (H, H) torch-style (out, in); bias/gamma/beta: (H,).

    Output dtype == x.dtype (no post-kernel cast pass).
    """
    B, S, H = x.shape
    rows = B * S
    out_dtype = x.dtype

    x_bytes = jnp.dtype(x.dtype).itemsize
    mm_bytes = jnp.dtype(matmul_dtype).itemsize
    sub = 16 if x_bytes < 4 else 8            # sublane packing of x / output rows
    Hp = _round_up(H, 128)                    # lane-padded width Mosaic uses in VMEM

    # Row tile: as big as the VMEM budget allows, clamped to the row count.
    tm = max(sub, min(_round_up(tm, sub), _round_up(rows, sub)))

    def vmem_est(t, w_bufs):
        w = w_bufs * Hp * Hp * mm_bytes       # resident W^T
        xt = 2 * t * Hp * x_bytes             # double-buffered x tile
        ot = 2 * t * Hp * x_bytes             # double-buffered output tile
        mid = 3 * t * Hp * 4                  # f32 h / centered / y intermediates
        pp = 3 * 2 * Hp * 4                   # bias / gamma / beta
        return w + xt + ot + mid + pp

    while tm > sub and vmem_est(tm, 1) > vmem_budget_bytes:
        tm = max(sub, _round_up(tm // 2, sub))
    # Keep >=2 grid steps when there are enough rows so the "parallel" axis can
    # be sharded across v7x's two TensorCores.
    if rows >= 2 * sub:
        while pl.cdiv(rows, tm) < 2 and tm > sub:
            tm = max(sub, _round_up(tm // 2, sub))
    # TODO(synk): if H grows so large that a resident W^T alone blows the v7x
    # 64 MiB VMEM (bf16 H>=4096), add K/N tiling with an f32 accumulator
    # scratch (LN applied after the last K step); not needed for this head.

    grid = (pl.cdiv(rows, tm),)               # partial tail block handled by Pallas

    x2d = x.reshape(rows, H)                  # contiguous view, no pad / no cast

    # NOTE: in a real model these parameter preps should be done once at load
    # time (or the weight fed untransposed via a transposed-RHS dot_general),
    # not on every call; they are O(H^2) and constant across calls.
    w_t = weight.T.astype(matmul_dtype)       # y = x @ W^T
    b2d = bias.astype(jnp.float32).reshape(1, H)
    g2d = gamma.astype(jnp.float32).reshape(1, H)
    beta2d = beta.astype(jnp.float32).reshape(1, H)

    vmem_limit = int(min(max(vmem_est(tm, 2) * 5 // 4, 8 * 1024 * 1024),
                         48 * 1024 * 1024))   # <=48 MiB: safe on v7x's 64 MiB

    kernel = functools.partial(_head_transform_kernel,
                               matmul_dtype=matmul_dtype,
                               use_tanh_gelu=use_tanh_gelu)

    def build(resident_mode):
        def resident_spec(shape):
            if resident_mode is None:
                return pl.BlockSpec(shape, lambda i: (0, 0))
            return pl.BlockSpec(shape, lambda i: (0, 0),
                                pipeline_mode=resident_mode)
        return pl.pallas_call(
            kernel,
            out_shape=jax.ShapeDtypeStruct((rows, H), out_dtype),
            grid_spec=pltpu.PrefetchScalarGridSpec(
                num_scalar_prefetch=0,
                grid=grid,
                in_specs=[
                    pl.BlockSpec((tm, H), lambda i: (i, 0)),   # x tile
                    resident_spec((H, H)),                     # W^T (resident)
                    resident_spec((1, H)),                     # bias
                    resident_spec((1, H)),                     # LN gamma
                    resident_spec((1, H)),                     # LN beta
                ],
                out_specs=pl.BlockSpec((tm, H), lambda i: (i, 0)),
            ),
            compiler_params=pltpu.CompilerParams(
                dimension_semantics=("parallel",),   # row axis -> megacore split
                vmem_limit_bytes=vmem_limit,
            ),
        )

    try:
        # Single-buffer the resident operands (constant index_map => one fetch).
        out2d = build(pl.Buffered(1))(x2d, w_t, b2d, g2d, beta2d)
    except Exception:
        # Fallback for Pallas versions without pipeline_mode support: default
        # double-buffered resident operands (identical results, more VMEM).
        out2d = build(None)(x2d, w_t, b2d, g2d, beta2d)

    return out2d.reshape(B, S, H)


if __name__ == "__main__":
    B, S, H = 2, 8, 32   # batch=2, seq=8, hidden=32

    key = jax.random.PRNGKey(0)
    kx, kw, kb, kg, kbeta = jax.random.split(key, 5)

    x = jax.random.normal(kx, (B, S, H), dtype=jnp.float32)
    # Deterministic synthetic params (shapes per nn.Linear(H, H) / LayerNorm(H)).
    weight = jax.random.normal(kw, (H, H), dtype=jnp.float32) * (1.0 / math.sqrt(H))
    bias = jax.random.normal(kb, (H,), dtype=jnp.float32) * 0.02
    gamma = 1.0 + 0.1 * jax.random.normal(kg, (H,), dtype=jnp.float32)
    beta = 0.1 * jax.random.normal(kbeta, (H,), dtype=jnp.float32)

    # Pure-JAX f32 reference (exact-erf GELU, two-pass LayerNorm).
    h = x @ weight.T + bias
    h = h * 0.5 * (1.0 + lax.erf(h / math.sqrt(2.0)))
    mu = jnp.mean(h, axis=-1, keepdims=True)
    var = jnp.mean((h - mu) ** 2, axis=-1, keepdims=True)
    ref = (h - mu) * lax.rsqrt(var + 1e-5) * gamma + beta

    # f32 MXU path: tight check of the fused kernel semantics.
    out_f32 = cxr_flamingo_head_transform(x, weight, bias, gamma, beta,
                                          matmul_dtype=jnp.float32)
    jax.block_until_ready(out_f32)
    assert out_f32.dtype == x.dtype
    assert jnp.allclose(out_f32, ref, atol=1e-5, rtol=1e-5)

    # bf16 MXU path (default / production config): looser tolerance.
    out_bf16 = cxr_flamingo_head_transform(x, weight, bias, gamma, beta)
    jax.block_until_ready(out_bf16)
    assert jnp.allclose(out_bf16, ref, atol=3e-2, rtol=3e-2)

    # tanh-approx GELU perf option (EUP slot): small numeric deviation expected.
    out_tanh = cxr_flamingo_head_transform(x, weight, bias, gamma, beta,
                                           use_tanh_gelu=True)
    jax.block_until_ready(out_tanh)
    assert jnp.allclose(out_tanh, ref, atol=5e-2, rtol=5e-2)

    print("KERNEL_OK")
</pallas_src>

<mosaic_0001>
module attributes {stable_mosaic.version = 11 : i64} {
  func.func @_head_transform_kernel(%arg0: i32, %arg1: memref<8x32xf32, #tpu.memory_space<vmem>>, %arg2: memref<32x32xf32, #tpu.memory_space<vmem>>, %arg3: memref<1x32xf32, #tpu.memory_space<vmem>>, %arg4: memref<1x32xf32, #tpu.memory_space<vmem>>, %arg5: memref<1x32xf32, #tpu.memory_space<vmem>>, %arg6: memref<8x32xf32, #tpu.memory_space<vmem>>) attributes {dimension_semantics = [#tpu.dimension_semantics<parallel>], iteration_bounds = array<i64: 2>, scalar_prefetch = 0 : i64, scratch_operands = 0 : i64, tpu.core_type = #tpu.core_type<tc>, window_params = [{transform_indices = @transform_0, window_bounds = array<i64: 8, 32>}, {pipeline_mode = #tpu.pipeline_mode<synchronous>, transform_indices = @transform_1, window_bounds = array<i64: 32, 32>}, {pipeline_mode = #tpu.pipeline_mode<synchronous>, transform_indices = @transform_2, window_bounds = array<i64: 1, 32>}, {pipeline_mode = #tpu.pipeline_mode<synchronous>, transform_indices = @transform_3, window_bounds = array<i64: 1, 32>}, {pipeline_mode = #tpu.pipeline_mode<synchronous>, transform_indices = @transform_4, window_bounds = array<i64: 1, 32>}, {transform_indices = @transform_5, window_bounds = array<i64: 8, 32>}]} {
    %c0 = arith.constant 0 : index
    %c0_0 = arith.constant 0 : index
    %0 = vector.load %arg1[%c0, %c0_0] : memref<8x32xf32, #tpu.memory_space<vmem>>, vector<8x32xf32>
    %c0_1 = arith.constant 0 : index
    %c0_2 = arith.constant 0 : index
    %1 = vector.load %arg2[%c0_1, %c0_2] : memref<32x32xf32, #tpu.memory_space<vmem>>, vector<32x32xf32>
    %cst = arith.constant dense<0.000000e+00> : vector<8x32xf32>
    %2 = tpu.matmul %0, %1, %cst {dimension_numbers = #tpu.dot_dimension_numbers<[1], [0], [0], [1], [0, 0, 1, 1], [], []>, precision = #tpu.contract_precision<fp32>} : vector<8x32xf32>, vector<32x32xf32>, vector<8x32xf32> -> vector<8x32xf32>
    %c0_3 = arith.constant 0 : index
    %c0_4 = arith.constant 0 : index
    %3 = vector.load %arg3[%c0_3, %c0_4] : memref<1x32xf32, #tpu.memory_space<vmem>>, vector<1x32xf32>
    %4 = vector.broadcast %3 : vector<1x32xf32> to vector<8x32xf32>
    %5 = arith.addf %2, %4 : vector<8x32xf32>
    %cst_5 = arith.constant 5.000000e-01 : f32
    %6 = vector.broadcast %cst_5 : f32 to vector<8x32xf32>
    %7 = arith.mulf %6, %5 : vector<8x32xf32>
    %cst_6 = arith.constant 0.707106769 : f32
    %8 = vector.broadcast %cst_6 : f32 to vector<8x32xf32>
    %9 = arith.mulf %5, %8 : vector<8x32xf32>
    %10 = math.erf %9 : vector<8x32xf32>
    %cst_7 = arith.constant 1.000000e+00 : f32
    %11 = vector.broadcast %cst_7 : f32 to vector<8x32xf32>
    %12 = arith.addf %11, %10 : vector<8x32xf32>
    %13 = arith.mulf %7, %12 : vector<8x32xf32>
    %cst_8 = arith.constant dense<0.000000e+00> : vector<8xf32>
    %14 = vector.multi_reduction <add>, %13, %cst_8 [1] : vector<8x32xf32> to vector<8xf32>
    %15 = vector.shape_cast %14 : vector<8xf32> to vector<8x1xf32>
    %cst_9 = arith.constant 3.125000e-02 : f32
    %16 = vector.broadcast %cst_9 : f32 to vector<8x1xf32>
    %17 = arith.mulf %15, %16 : vector<8x1xf32>
    %18 = vector.broadcast %17 : vector<8x1xf32> to vector<8x32xf32>
    %19 = arith.subf %13, %18 : vector<8x32xf32>
    %20 = arith.mulf %19, %19 : vector<8x32xf32>
    %cst_10 = arith.constant dense<0.000000e+00> : vector<8xf32>
    %21 = vector.multi_reduction <add>, %20, %cst_10 [1] : vector<8x32xf32> to vector<8xf32>
    %22 = vector.shape_cast %21 : vector<8xf32> to vector<8x1xf32>
    %cst_11 = arith.constant 3.125000e-02 : f32
    %23 = vector.broadcast %cst_11 : f32 to vector<8x1xf32>
    %24 = arith.mulf %22, %23 : vector<8x1xf32>
    %cst_12 = arith.constant 9.99999974E-6 : f32
    %25 = vector.broadcast %cst_12 : f32 to vector<8x1xf32>
    %26 = arith.addf %24, %25 : vector<8x1xf32>
    %27 = math.rsqrt %26 : vector<8x1xf32>
    %28 = vector.broadcast %27 : vector<8x1xf32> to vector<8x32xf32>
    %29 = arith.mulf %19, %28 : vector<8x32xf32>
    %c0_13 = arith.constant 0 : index
    %c0_14 = arith.constant 0 : index
    %30 = vector.load %arg4[%c0_13, %c0_14] : memref<1x32xf32, #tpu.memory_space<vmem>>, vector<1x32xf32>
    %31 = vector.broadcast %30 : vector<1x32xf32> to vector<8x32xf32>
    %32 = arith.mulf %29, %31 : vector<8x32xf32>
    %c0_15 = arith.constant 0 : index
    %c0_16 = arith.constant 0 : index
    %33 = vector.load %arg5[%c0_15, %c0_16] : memref<1x32xf32, #tpu.memory_space<vmem>>, vector<1x32xf32>
    %34 = vector.broadcast %33 : vector<1x32xf32> to vector<8x32xf32>
    %35 = arith.addf %32, %34 : vector<8x32xf32>
    %c0_17 = arith.constant 0 : index
    %c0_18 = arith.constant 0 : index
    %36 = vector.load %arg6[%c0_17, %c0_18] : memref<8x32xf32, #tpu.memory_space<vmem>>, vector<8x32xf32>
    tpu.vector_store %arg6[%c0_17, %c0_18], %35 {strides = array<i32>} : memref<8x32xf32, #tpu.memory_space<vmem>>, vector<8x32xf32>,
    return
  }
  func.func @transform_0(%arg0: i32) -> (i32, i32) {
    %c0_i32 = arith.constant 0 : i32
    %c0_i32_0 = arith.constant 0 : i32
    return %arg0, %c0_i32 : i32, i32
  }
  func.func @transform_1(%arg0: i32) -> (i32, i32) {
    %c0_i32 = arith.constant 0 : i32
    %c0_i32_0 = arith.constant 0 : i32
    %c0_i32_1 = arith.constant 0 : i32
    return %c0_i32, %c0_i32_0 : i32, i32
  }
  func.func @transform_2(%arg0: i32) -> (i32, i32) {
    %c0_i32 = arith.constant 0 : i32
    %c0_i32_0 = arith.constant 0 : i32
    %c0_i32_1 = arith.constant 0 : i32
    return %c0_i32, %c0_i32_0 : i32, i32
  }
  func.func @transform_3(%arg0: i32) -> (i32, i32) {
    %c0_i32 = arith.constant 0 : i32
    %c0_i32_0 = arith.constant 0 : i32
    %c0_i32_1 = arith.constant 0 : i32
    return %c0_i32, %c0_i32_0 : i32, i32
  }
  func.func @transform_4(%arg0: i32) -> (i32, i32) {
    %c0_i32 = arith.constant 0 : i32
    %c0_i32_0 = arith.constant 0 : i32
    %c0_i32_1 = arith.constant 0 : i32
    return %c0_i32, %c0_i32_0 : i32, i32
  }
  func.func @transform_5(%arg0: i32) -> (i32, i32) {
    %c0_i32 = arith.constant 0 : i32
    %c0_i32_0 = arith.constant 0 : i32
    return %arg0, %c0_i32 : i32, i32
  }
}

module attributes {stable_mosaic.version = 11 : i64} {
  func.func @_head_transform_kernel(%arg0: i32, %arg1: memref<8x32xf32, #tpu.memory_space<vmem>>, %arg2: memref<32x32xf32, #tpu.memory_space<vmem>>, %arg3: memref<1x32xf32, #tpu.memory_space<vmem>>, %arg4: memref<1x32xf32, #tpu.memory_space<vmem>>, %arg5: memref<1x32xf32, #tpu.memory_space<vmem>>, %arg6: memref<8x32xf32, #tpu.memory_space<vmem>>) attributes {dimension_semantics = [#tpu.dimension_semantics<parallel>], iteration_bounds = array<i64: 2>, scalar_prefetch = 0 : i64, scratch_operands = 0 : i64, tpu.core_type = #tpu.core_type<tc>, window_params = [{transform_indices = @transform_0, window_bounds = array<i64: 8, 32>}, {pipeline_mode = #tpu.pipeline_mode<synchronous>, transform_indices = @transform_1, window_bounds = array<i64: 32, 32>}, {pipeline_mode = #tpu.pipeline_mode<synchronous>, transform_indices = @transform_2, window_bounds = array<i64: 1, 32>}, {pipeline_mode = #tpu.pipeline_mode<synchronous>, transform_indices = @transform_3, window_bounds = array<i64: 1, 32>}, {pipeline_mode = #tpu.pipeline_mode<synchronous>, transform_indices = @transform_4, window_bounds = array<i64: 1, 32>}, {transform_indices = @transform_5, window_bounds = array<i64: 8, 32>}]} {
    %c0 = arith.constant 0 : index
    %c0_0 = arith.constant 0 : index
    %0 = vector.load %arg1[%c0, %c0_0] : memref<8x32xf32, #tpu.memory_space<vmem>>, vector<8x32xf32>
    %c0_1 = arith.constant 0 : index
    %c0_2 = arith.constant 0 : index
    %1 = vector.load %arg2[%c0_1, %c0_2] : memref<32x32xf32, #tpu.memory_space<vmem>>, vector<32x32xf32>
    %cst = arith.constant dense<0.000000e+00> : vector<8x32xf32>
    %2 = tpu.matmul %0, %1, %cst {dimension_numbers = #tpu.dot_dimension_numbers<[1], [0], [0], [1], [0, 0, 1, 1], [], []>, precision = #tpu.contract_precision<fp32>} : vector<8x32xf32>, vector<32x32xf32>, vector<8x32xf32> -> vector<8x32xf32>
    %c0_3 = arith.constant 0 : index
    %c0_4 = arith.constant 0 : index
    %3 = vector.load %arg3[%c0_3, %c0_4] : memref<1x32xf32, #tpu.memory_space<vmem>>, vector<1x32xf32>
    %4 = vector.broadcast %3 : vector<1x32xf32> to vector<8x32xf32>
    %5 = arith.addf %2, %4 : vector<8x32xf32>
    %cst_5 = arith.constant 5.000000e-01 : f32
    %6 = vector.broadcast %cst_5 : f32 to vector<8x32xf32>
    %7 = arith.mulf %6, %5 : vector<8x32xf32>
    %cst_6 = arith.constant 0.707106769 : f32
    %8 = vector.broadcast %cst_6 : f32 to vector<8x32xf32>
    %9 = arith.mulf %5, %8 : vector<8x32xf32>
    %10 = math.erf %9 : vector<8x32xf32>
    %cst_7 = arith.constant 1.000000e+00 : f32
    %11 = vector.broadcast %cst_7 : f32 to vector<8x32xf32>
    %12 = arith.addf %11, %10 : vector<8x32xf32>
    %13 = arith.mulf %7, %12 : vector<8x32xf32>
    %cst_8 = arith.constant dense<0.000000e+00> : vector<8xf32>
    %14 = vector.multi_reduction <add>, %13, %cst_8 [1] : vector<8x32xf32> to vector<8xf32>
    %15 = vector.shape_cast %14 : vector<8xf32> to vector<8x1xf32>
    %cst_9 = arith.constant 3.125000e-02 : f32
    %16 = vector.broadcast %cst_9 : f32 to vector<8x1xf32>
    %17 = arith.mulf %15, %16 : vector<8x1xf32>
    %18 = vector.broadcast %17 : vector<8x1xf32> to vector<8x32xf32>
    %19 = arith.subf %13, %18 : vector<8x32xf32>
    %20 = arith.mulf %19, %19 : vector<8x32xf32>
    %cst_10 = arith.constant dense<0.000000e+00> : vector<8xf32>
    %21 = vector.multi_reduction <add>, %20, %cst_10 [1] : vector<8x32xf32> to vector<8xf32>
    %22 = vector.shape_cast %21 : vector<8xf32> to vector<8x1xf32>
    %cst_11 = arith.constant 3.125000e-02 : f32
    %23 = vector.broadcast %cst_11 : f32 to vector<8x1xf32>
    %24 = arith.mulf %22, %23 : vector<8x1xf32>
    %cst_12 = arith.constant 9.99999974E-6 : f32
    %25 = vector.broadcast %cst_12 : f32 to vector<8x1xf32>
    %26 = arith.addf %24, %25 : vector<8x1xf32>
    %27 = math.rsqrt %26 : vector<8x1xf32>
    %28 = vector.broadcast %27 : vector<8x1xf32> to vector<8x32xf32>
    %29 = arith.mulf %19, %28 : vector<8x32xf32>
    %c0_13 = arith.constant 0 : index
    %c0_14 = arith.constant 0 : index
    %30 = vector.load %arg4[%c0_13, %c0_14] : memref<1x32xf32, #tpu.memory_space<vmem>>, vector<1x32xf32>
    %31 = vector.broadcast %30 : vector<1x32xf32> to vector<8x32xf32>
    %32 = arith.mulf %29, %31 : vector<8x32xf32>
    %c0_15 = arith.constant 0 : index
    %c0_16 = arith.constant 0 : index
    %33 = vector.load %arg5[%c0_15, %c0_16] : memref<1x32xf32, #tpu.memory_space<vmem>>, vector<1x32xf32>
    %34 = vector.broadcast %33 : vector<1x32xf32> to vector<8x32xf32>
    %35 = arith.addf %32, %34 : vector<8x32xf32>
    %c0_17 = arith.constant 0 : index
    %c0_18 = arith.constant 0 : index
    %36 = vector.load %arg6[%c0_17, %c0_18] : memref<8x32xf32, #tpu.memory_space<vmem>>, vector<8x32xf32>
    tpu.vector_store %arg6[%c0_17, %c0_18], %35 {strides = array<i32>} : memref<8x32xf32, #tpu.memory_space<vmem>>, vector<8x32xf32>,
    return
  }
  func.func @transform_0(%arg0: i32) -> (i32, i32) {
    %c0_i32 = arith.constant 0 : i32
    %c0_i32_0 = arith.constant 0 : i32
    return %arg0, %c0_i32 : i32, i32
  }
  func.func @transform_1(%arg0: i32) -> (i32, i32) {
    %c0_i32 = arith.constant 0 : i32
    %c0_i32_0 = arith.constant 0 : i32
    %c0_i32_1 = arith.constant 0 : i32
    return %c0_i32, %c0_i32_0 : i32, i32
  }
  func.func @transform_2(%arg0: i32) -> (i32, i32) {
    %c0_i32 = arith.constant 0 : i32
    %c0_i32_0 = arith.constant 0 : i32
    %c0_i32_1 = arith.constant 0 : i32
    return %c0_i32, %c0_i32_0 : i32, i32
  }
  func.func @transform_3(%arg0: i32) -> (i32, i32) {
    %c0_i32 = arith.constant 0 : i32
    %c0_i32_0 = arith.constant 0 : i32
    %c0_i32_1 = arith.constant 0 : i32
    return %c0_i32, %c0_i32_0 : i32, i32
  }
  func.func @transform_4(%arg0: i32) -> (i32, i32) {
    %c0_i32 = arith.constant 0 : i32
    %c0_i32_0 = arith.constant 0 : i32
    %c0_i32_1 = arith.constant 0 : i32
    return %c0_i32, %c0_i32_0 : i32, i32
  }
  func.func @transform_5(%arg0: i32) -> (i32, i32) {
    %c0_i32 = arith.constant 0 : i32
    %c0_i32_0 = arith.constant 0 : i32
    return %arg0, %c0_i32 : i32, i32
  }
}

</mosaic_0001>

<llo_original>
// kernel: tpu_custom_call.1
$region0: #{tpu_custom_call.1}
  #allocation0 [shape = 'u32[]', space=smem, size = 0x4, offset = 0x4, fixed_abs, tag = 'smem constant byte address 0x4 - core index']
  #allocation1 [shape = 'u32[72,128]{1,0:T(1,128)}', space=vmem, size = 0x9000, scoped, tag = 'internal scratch']
  %s0 = inlined_call_operand.hbm [shape: f32[16,32], index: 0, kind: input, shape index: {}]
  %s1 = inlined_call_operand.hbm [shape: f32[32,32], index: 1, kind: input, shape index: {}]
  %s2 = inlined_call_operand.vmem [shape: f32[1,32], index: 2, kind: input, shape index: {}]
  %s3 = inlined_call_operand.vmem [shape: f32[1,32], index: 3, kind: input, shape index: {}]
  %s4 = inlined_call_operand.vmem [shape: f32[1,32], index: 4, kind: input, shape index: {}]
  %s5 = inlined_call_operand.hbm [shape: f32[16,32], index: 5, kind: output, shape index: {}]
  %s6 = sld [smem:[#allocation0]]
  $region61: #{tpu_custom_call.1} parent=0
    _
  %s8 = ssub.s32 1, %s6
  %s9 = scalar_select 0, %s8, %s6
  $region1: #{tpu_custom_call.1} parent=0
    #allocation2 [shape = 'u8[8192]{0}', space=vmem, size = 0x2000, scoped, tag = 'input window, operand 0']
    #allocation3 [shape = 's32[2]{0}', space=sflag, size = 0x8, scoped, tag = 'scoped memory for tpu_custom_call.1']
    #allocation4 [shape = 's32[2]{0}', space=sflag, size = 0x8, scoped, tag = 'scoped memory for tpu_custom_call.1']
    #allocation5 [shape = 'u8[16384]{0}', space=vmem, size = 0x4000, scoped, tag = 'input window, operand 1, single buffered']
    #allocation6 [shape = 's32[1]{0}', space=sflag, size = 0x4, scoped, tag = 'scoped memory for tpu_custom_call.1']
    #allocation7 [shape = 'u8[8192]{0}', space=vmem, size = 0x2000, scoped, tag = 'output window, operand 0']
    %10 = vsyncpa [#allocation3], 0
    %s11 = scalar_lea.sflag [#allocation3], 1
    %12 = vsyncpa %s11, 0
    %13 = vsyncpa [#allocation6], 0
    %14 = vsyncpa [#allocation4], 0
    %s15 = scalar_lea.sflag [#allocation4], 1
    %16 = vsyncpa %s15, 0
    loop: start=0, step=1, limit=4
    $region2: #{tpu_custom_call.1} parent=1 // loop_pre_header
      _
    $region3: #{tpu_custom_call.1} parent=1 // loop_header
      %s18 = sphi 0, %s22
      %p19 = scmp.ge.s32.totalorder %s18, 4
      %s28 = sphi 0, %s30
      %s31 = sphi 0, %s28
      %s32 = sphi 0, %s31
      %s48 = sphi 0, %s32
      %s52 = sphi 0, %s52
      %s54 = sphi 0, %s52
      %s55 = sphi 0, %s54
      %s69 = sphi 0, %s55
      %s73 = sphi 0, %s73
      %s75 = sphi 0, %s73
      %s76 = sphi 0, %s75
      %s90 = sphi 0, %s76
      %s94 = sphi 0, %s94
      %s96 = sphi 0, %s94
      %s97 = sphi 0, %s96
      %s111 = sphi 0, %s97
      %s115 = sphi 0, %s115
      %s117 = sphi 0, %s115
      %s118 = sphi 0, %s117
      %s132 = sphi 0, %s118
      %s138 = sphi 0, %s140
      %s141 = sphi 0, %s138
      %s142 = sphi 0, %s141
      %s158 = sphi 0, %s142
    $region4: #{tpu_custom_call.1} parent=1 // loop_header_branch
      %21 = sbr.rel (%p19) target = $region8
    $region5: #{tpu_custom_call.1} parent=1 // loop_body
      %s23 = ssub.s32 %s18, 1
      %s24 = ssub.s32 %s18, 2
      %s25 = sadd.s32 %s18, 1
      %s26 = ssub.s32 %s18, %s25
      %p27 = scmp.eq.s32.totalorder %s26, 0
      %s29 = sadd.s32 %s28, 1
      %s30 = scalar_select %p27, %s28, %s29
      %p33 = pneg %p27
      %p34 = scmp.eq.s32.totalorder %s18, 1
      %p35 = por %p33, %p34
      %p36 = scmp.ne.s32.totalorder %s28, %s31
      %p37 = scmp.eq.s32.totalorder %s18, 0
      %p38 = por %p36, %p37
      %p39 = scmp.ne.s32.totalorder %s28, %s31
      %p40 = scmp.eq.s32.totalorder %s23, 1
      %p41 = por %p39, %p40
      %p42 = scmp.ne.s32.totalorder %s31, %s32
      %p43 = scmp.eq.s32.totalorder %s23, 0
      %p44 = por %p42, %p43
      %p45 = scmp.ne.s32.totalorder %s31, %s32
      %p46 = scmp.eq.s32.totalorder %s24, 1
      %p47 = por %p45, %p46
      %p49 = scmp.ne.s32.totalorder %s32, %s48
      %p50 = scmp.eq.s32.totalorder %s24, 0
      %p51 = por %p49, %p50
      %s53 = sadd.s32 %s52, 1
      %p56 = scmp.eq.s32.totalorder %s18, 1
      %p57 = scmp.ne.s32.totalorder %s52, %s54
      %p58 = scmp.eq.s32.totalorder %s18, 0
      %p59 = por %p57, %p58
      %p60 = scmp.ne.s32.totalorder %s52, %s54
      %p61 = scmp.eq.s32.totalorder %s23, 1
      %p62 = por %p60, %p61
      %p63 = scmp.ne.s32.totalorder %s54, %s55
      %p64 = scmp.eq.s32.totalorder %s23, 0
      %p65 = por %p63, %p64
      %p66 = scmp.ne.s32.totalorder %s54, %s55
      %p67 = scmp.eq.s32.totalorder %s24, 1
      %p68 = por %p66, %p67
      %p70 = scmp.ne.s32.totalorder %s55, %s69
      %p71 = scmp.eq.s32.totalorder %s24, 0
      %p72 = por %p70, %p71
      %s74 = sadd.s32 %s73, 1
      %p77 = scmp.eq.s32.totalorder %s18, 1
      %p78 = scmp.ne.s32.totalorder %s73, %s75
      %p79 = scmp.eq.s32.totalorder %s18, 0
      %p80 = por %p78, %p79
      %p81 = scmp.ne.s32.totalorder %s73, %s75
      %p82 = scmp.eq.s32.totalorder %s23, 1
      %p83 = por %p81, %p82
      %p84 = scmp.ne.s32.totalorder %s75, %s76
      %p85 = scmp.eq.s32.totalorder %s23, 0
      %p86 = por %p84, %p85
      %p87 = scmp.ne.s32.totalorder %s75, %s76
      %p88 = scmp.eq.s32.totalorder %s24, 1
      %p89 = por %p87, %p88
      %p91 = scmp.ne.s32.totalorder %s76, %s90
      %p92 = scmp.eq.s32.totalorder %s24, 0
      %p93 = por %p91, %p92
      %s95 = sadd.s32 %s94, 1
      %p98 = scmp.eq.s32.totalorder %s18, 1
      %p99 = scmp.ne.s32.totalorder %s94, %s96
      %p100 = scmp.eq.s32.totalorder %s18, 0
      %p101 = por %p99, %p100
      %p102 = scmp.ne.s32.totalorder %s94, %s96
      %p103 = scmp.eq.s32.totalorder %s23, 1
      %p104 = por %p102, %p103
      %p105 = scmp.ne.s32.totalorder %s96, %s97
      %p106 = scmp.eq.s32.totalorder %s23, 0
      %p107 = por %p105, %p106
      %p108 = scmp.ne.s32.totalorder %s96, %s97
      %p109 = scmp.eq.s32.totalorder %s24, 1
      %p110 = por %p108, %p109
      %p112 = scmp.ne.s32.totalorder %s97, %s111
      %p113 = scmp.eq.s32.totalorder %s24, 0
      %p114 = por %p112, %p113
      %s116 = sadd.s32 %s115, 1
      %p119 = scmp.eq.s32.totalorder %s18, 1
      %p120 = scmp.ne.s32.totalorder %s115, %s117
      %p121 = scmp.eq.s32.totalorder %s18, 0
      %p122 = por %p120, %p121
      %p123 = scmp.ne.s32.totalorder %s115, %s117
      %p124 = scmp.eq.s32.totalorder %s23, 1
      %p125 = por %p123, %p124
      %p126 = scmp.ne.s32.totalorder %s117, %s118
      %p127 = scmp.eq.s32.totalorder %s23, 0
      %p128 = por %p126, %p127
      %p129 = scmp.ne.s32.totalorder %s117, %s118
      %p130 = scmp.eq.s32.totalorder %s24, 1
      %p131 = por %p129, %p130
      %p133 = scmp.ne.s32.totalorder %s118, %s132
      %p134 = scmp.eq.s32.totalorder %s24, 0
      %p135 = por %p133, %p134
      %s136 = ssub.s32 %s18, %s25
      %p137 = scmp.eq.s32.totalorder %s136, 0
      %s139 = sadd.s32 %s138, 1
      %s140 = scalar_select %p137, %s138, %s139
      %p143 = pneg %p137
      %p144 = scmp.eq.s32.totalorder %s18, 1
      %p145 = por %p143, %p144
      %p146 = scmp.ne.s32.totalorder %s138, %s141
      %p147 = scmp.eq.s32.totalorder %s18, 0
      %p148 = por %p146, %p147
      %p149 = scmp.ne.s32.totalorder %s138, %s141
      %p150 = scmp.eq.s32.totalorder %s23, 1
      %p151 = por %p149, %p150
      %p152 = scmp.ne.s32.totalorder %s141, %s142
      %p153 = scmp.eq.s32.totalorder %s23, 0
      %p154 = por %p152, %p153
      %p155 = scmp.ne.s32.totalorder %s141, %s142
      %p156 = scmp.eq.s32.totalorder %s24, 1
      %p157 = por %p155, %p156
      %p159 = scmp.ne.s32.totalorder %s142, %s158
      %p160 = scmp.eq.s32.totalorder %s24, 0
      %p161 = por %p159, %p160
      %p162 = scmp.le.s32.totalorder 1, %s18
      %p163 = scmp.lt.s32.totalorder %s18, 3
      %p164 = pnand %p162, %p163
      %p165 = pneg %p164
      // Predicated region
      $region9: #{tpu_custom_call.1} parent=5 // pred_check
        _
      $region10: #{tpu_custom_call.1} parent=5 // pred_check_branch
        %167 = sbr.rel (%p164) target = $region12
      $region11: #{tpu_custom_call.1} parent=5 // pred_region
        %s168 = ssub.s32 %s18, 1
        // Predicated region
        $region13: #{tpu_custom_call.1} parent=11 // pred_check
          %p169 = pneg %p65
        $region14: #{tpu_custom_call.1} parent=11 // pred_check_branch
          %171 = sbr.rel (%p169) target = $region16
        $region15: #{tpu_custom_call.1} parent=11 // pred_region
          %173 = vsyncadd [#allocation6], 0
          %s174 = sshll.u32 %s1, 4
          %s175 = int_to_ptr.hbm [resolvable:$true] %s174
          %s176 = sshll.u32 [#allocation5], 4
          %s177 = int_to_ptr.vmem [resolvable:$true] %s176
          %182 = dma.hbm_to_vmem [thread:$0]  %s175, 512, %s177, [#allocation6], 128, 128, 8
        $region16: #{tpu_custom_call.1} parent=11 // pred_fallthru
          _
        // Predicated region
        $region17: #{tpu_custom_call.1} parent=11 // pred_check
          %p183 = pneg %p86
        $region18: #{tpu_custom_call.1} parent=11 // pred_check_branch
          %185 = sbr.rel (%p183) target = $region20
        $region19: #{tpu_custom_call.1} parent=11 // pred_region
          _
        $region20: #{tpu_custom_call.1} parent=11 // pred_fallthru
          _
        // Predicated region
        $region21: #{tpu_custom_call.1} parent=11 // pred_check
          %p186 = pneg %p107
        $region22: #{tpu_custom_call.1} parent=11 // pred_check_branch
          %188 = sbr.rel (%p186) target = $region24
        $region23: #{tpu_custom_call.1} parent=11 // pred_region
          _
        $region24: #{tpu_custom_call.1} parent=11 // pred_fallthru
          _
        // Predicated region
        $region25: #{tpu_custom_call.1} parent=11 // pred_check
          %p189 = pneg %p128
        $region26: #{tpu_custom_call.1} parent=11 // pred_check_branch
          %191 = sbr.rel (%p189) target = $region28
        $region27: #{tpu_custom_call.1} parent=11 // pred_region
          _
        $region28: #{tpu_custom_call.1} parent=11 // pred_fallthru
          _
      $region12: #{tpu_custom_call.1} parent=5 // pred_fallthru
        _
      %p192 = scmp.lt.s32.totalorder %s18, 2
      // Predicated region
      $region29: #{tpu_custom_call.1} parent=5 // pred_check
        %p193 = pneg %p192
      $region30: #{tpu_custom_call.1} parent=5 // pred_check_branch
        %195 = sbr.rel (%p193) target = $region32
      $region31: #{tpu_custom_call.1} parent=5 // pred_region
        // Predicated region
        $region33: #{tpu_custom_call.1} parent=31 // pred_check
          %p196 = pneg %p38
        $region34: #{tpu_custom_call.1} parent=31 // pred_check_branch
          %198 = sbr.rel (%p196) target = $region36
        $region35: #{tpu_custom_call.1} parent=31 // pred_region
          %s199 = sand.u32 %s28, 1
          %s200 = scalar_lea.sflag [#allocation3], %s199
          %s201 = sand.u32 %s28, 1
          %s202 = smul.addr %s201, 8
          %s203 = scalar_lea.vmem [#allocation2], %s202
          %205 = vsyncadd %s200, 0
          %s206 = smul.addr %s18, 8
          %s207 = scalar_lea.hbm %s0, %s206
          %s209 = sshll.u32 %s207, 4
          %s210 = int_to_ptr.hbm [resolvable:$true] %s209
          %s211 = sshll.u32 %s203, 4
          %s212 = int_to_ptr.vmem [resolvable:$true] %s211
          %214 = dma.hbm_to_vmem [thread:$0]  %s210, 128, %s212, %s200
        $region36: #{tpu_custom_call.1} parent=31 // pred_fallthru
          _
      $region32: #{tpu_custom_call.1} parent=5 // pred_fallthru
        _
      %p215 = scmp.le.s32.totalorder 1, %s18
      %p216 = scmp.lt.s32.totalorder %s18, 3
      %p217 = pnand %p215, %p216
      %p218 = pneg %p217
      // Predicated region
      $region37: #{tpu_custom_call.1} parent=5 // pred_check
        _
      $region38: #{tpu_custom_call.1} parent=5 // pred_check_branch
        %220 = sbr.rel (%p217) target = $region40
      $region39: #{tpu_custom_call.1} parent=5 // pred_region
        %s221 = ssub.s32 %s18, 1
        %s222 = sand.u32 %s31, 1
        %s223 = scalar_lea.sflag [#allocation3], %s222
        %s224 = sand.u32 %s31, 1
        %s225 = smul.addr %s224, 8
        %s226 = scalar_lea.vmem [#allocation2], %s225
        // Predicated region
        $region41: #{tpu_custom_call.1} parent=39 // pred_check
          %p227 = pneg %p44
        $region42: #{tpu_custom_call.1} parent=39 // pred_check_branch
          %229 = sbr.rel (%p227) target = $region44
        $region43: #{tpu_custom_call.1} parent=39 // pred_region
          %231 = dma.done %s223, 128
        $region44: #{tpu_custom_call.1} parent=39 // pred_fallthru
          _
        // Predicated region
        $region45: #{tpu_custom_call.1} parent=39 // pred_check
          %p232 = pneg %p65
        $region46: #{tpu_custom_call.1} parent=39 // pred_check_branch
          %234 = sbr.rel (%p232) target = $region48
        $region47: #{tpu_custom_call.1} parent=39 // pred_region
          %236 = dma.done [#allocation6], 512
        $region48: #{tpu_custom_call.1} parent=39 // pred_fallthru
          _
        %s237 = sand.u32 %s31, 1
        %s238 = scalar_lea.sflag [#allocation3], %s237
        %s239 = sand.u32 %s31, 1
        %s240 = smul.addr %s239, 8
        %s241 = scalar_lea.vmem [#allocation2], %s240
        %p242 = pneg %p44
        %p243 = pneg %p41
        %p244 = pneg %p65
        %p245 = pneg %p62
        %p246 = pneg %p86
        %p247 = pneg %p83
        %p248 = pneg %p107
        %p249 = pneg %p104
        %p250 = pneg %p128
        %p251 = pneg %p125
        %p252 = pneg %p154
        %p253 = pneg %p151
        %s254 = sand.u32 %s141, 1
        %s255 = scalar_lea.sflag [#allocation4], %s254
        %s256 = sand.u32 %s141, 1
        %s257 = smul.addr %s256, 8
        %s258 = scalar_lea.vmem [#allocation7], %s257
        %v259 = vld [vmem:[%s226] sm:$0xff]
        %v260 = vld [vmem:[#allocation5] sm:$0xff]
        %v261 = vld [vmem:[#allocation5 + $0x8] sm:$0xff]
        %v262 = vld [vmem:[#allocation5 + $0x10] sm:$0xff]
        %v263 = vld [vmem:[#allocation5 + $0x18] sm:$0xff]
        %v264 = vld [vmem:[%s2] sm:$0x1]
        %v266 = vperm.slane %v264, 0
        %vm268 = vcmask 261120
        %v270 = vsel %vm268, %v259, 0
        %272 = vmatpush.msra.mxu0 0.0
        %273 = vmatpush.msra.mxu0 0.0
        %274 = vmatpush.msra.mxu0 0.0
        %275 = vmatpush.msra.mxu0 0.0
        %276 = vmatpush.msra.mxu0 0.0
        %277 = vmatpush.msra.mxu0 0.0
        %278 = vmatpush.msra.mxu0 0.0
        %279 = vmatpush.msra.mxu0 0.0
        %280 = vmatpush.msra.mxu0 0.0
        %281 = vmatpush.msra.mxu0 0.0
        %282 = vmatpush.msra.mxu0 0.0
        %283 = vmatpush.msra.mxu0 0.0
        %v284 = vand.u32 %v263, 4294901760
        %285 = vmatpush.msra.mxu0 %v284
        %v286 = vand.u32 %v262, 4294901760
        %287 = vmatpush.msra.mxu0 %v286
        %v288 = vand.u32 %v261, 4294901760
        %289 = vmatpush.msra.mxu0 %v288
        %v290 = vand.u32 %v260, 4294901760
        %291 = vmatpush.msra.mxu0 %v290
        %v292 = vand.u32 %v270, 4294901760
        %v293 = vsub.f32 %v270, %v292
        %v294 = vand.u32 %v293, 4294901760
        %v295 = vsub.f32 %v293, %v294
        %v296 = vand.u32 %v295, 4294901760
        %297 = vmatmul.f32.gmra.mxu0 %v296
        %v298 = vpop.f32.mrf.mxu0
        %v299 = vadd.f32 %v266, %v298
        %300 = vdwg.mxu0
        %301 = vmatpush.msra.mxu0 0.0
        %302 = vmatpush.msra.mxu0 0.0
        %303 = vmatpush.msra.mxu0 0.0
        %304 = vmatpush.msra.mxu0 0.0
        %305 = vmatpush.msra.mxu0 0.0
        %306 = vmatpush.msra.mxu0 0.0
        %307 = vmatpush.msra.mxu0 0.0
        %308 = vmatpush.msra.mxu0 0.0
        %309 = vmatpush.msra.mxu0 0.0
        %310 = vmatpush.msra.mxu0 0.0
        %311 = vmatpush.msra.mxu0 0.0
        %312 = vmatpush.msra.mxu0 0.0
        %v313 = vand.u32 %v263, 4294901760
        %v314 = vsub.f32 %v263, %v313
        %v315 = vand.u32 %v314, 4294901760
        %v316 = vsub.f32 %v314, %v315
        %v317 = vand.u32 %v316, 4294901760
        %318 = vmatpush.msra.mxu0 %v317
        %v319 = vand.u32 %v262, 4294901760
        %v320 = vsub.f32 %v262, %v319
        %v321 = vand.u32 %v320, 4294901760
        %v322 = vsub.f32 %v320, %v321
        %v323 = vand.u32 %v322, 4294901760
        %324 = vmatpush.msra.mxu0 %v323
        %v325 = vand.u32 %v261, 4294901760
        %v326 = vsub.f32 %v261, %v325
        %v327 = vand.u32 %v326, 4294901760
        %v328 = vsub.f32 %v326, %v327
        %v329 = vand.u32 %v328, 4294901760
        %330 = vmatpush.msra.mxu0 %v329
        %v331 = vand.u32 %v260, 4294901760
        %v332 = vsub.f32 %v260, %v331
        %v333 = vand.u32 %v332, 4294901760
        %v334 = vsub.f32 %v332, %v333
        %v335 = vand.u32 %v334, 4294901760
        %336 = vmatpush.msra.mxu0 %v335
        %v337 = vand.u32 %v270, 4294901760
        %338 = vmatmul.f32.gmra.mxu0 %v337
        %v339 = vpop.f32.mrf.mxu0
        %v340 = vadd.f32 %v299, %v339
        %341 = vdwg.mxu0
        %342 = vmatpush.msra.mxu0 0.0
        %343 = vmatpush.msra.mxu0 0.0
        %344 = vmatpush.msra.mxu0 0.0
        %345 = vmatpush.msra.mxu0 0.0
        %346 = vmatpush.msra.mxu0 0.0
        %347 = vmatpush.msra.mxu0 0.0
        %348 = vmatpush.msra.mxu0 0.0
        %349 = vmatpush.msra.mxu0 0.0
        %350 = vmatpush.msra.mxu0 0.0
        %351 = vmatpush.msra.mxu0 0.0
        %352 = vmatpush.msra.mxu0 0.0
        %353 = vmatpush.msra.mxu0 0.0
        %v354 = vand.u32 %v263, 4294901760
        %v355 = vsub.f32 %v263, %v354
        %356 = vmatpush.msra.mxu0 %v355
        %v357 = vand.u32 %v262, 4294901760
        %v358 = vsub.f32 %v262, %v357
        %359 = vmatpush.msra.mxu0 %v358
        %v360 = vand.u32 %v261, 4294901760
        %v361 = vsub.f32 %v261, %v360
        %362 = vmatpush.msra.mxu0 %v361
        %v363 = vand.u32 %v260, 4294901760
        %v364 = vsub.f32 %v260, %v363
        %365 = vmatpush.msra.mxu0 %v364
        %v366 = vand.u32 %v270, 4294901760
        %v367 = vsub.f32 %v270, %v366
        %368 = vmatmul.f32.gmra.mxu0 %v367
        %v369 = vpop.f32.mrf.mxu0
        %v370 = vadd.f32 %v340, %v369
        %371 = vdwg.mxu0
        %372 = vmatpush.msra.mxu0 0.0
        %373 = vmatpush.msra.mxu0 0.0
        %374 = vmatpush.msra.mxu0 0.0
        %375 = vmatpush.msra.mxu0 0.0
        %376 = vmatpush.msra.mxu0 0.0
        %377 = vmatpush.msra.mxu0 0.0
        %378 = vmatpush.msra.mxu0 0.0
        %379 = vmatpush.msra.mxu0 0.0
        %380 = vmatpush.msra.mxu0 0.0
        %381 = vmatpush.msra.mxu0 0.0
        %382 = vmatpush.msra.mxu0 0.0
        %383 = vmatpush.msra.mxu0 0.0
        %v384 = vand.u32 %v263, 4294901760
        %385 = vmatpush.msra.mxu0 %v384
        %v386 = vand.u32 %v262, 4294901760
        %387 = vmatpush.msra.mxu0 %v386
        %v388 = vand.u32 %v261, 4294901760
        %389 = vmatpush.msra.mxu0 %v388
        %v390 = vand.u32 %v260, 4294901760
        %391 = vmatpush.msra.mxu0 %v390
        %v392 = vand.u32 %v270, 4294901760
        %v393 = vsub.f32 %v270, %v392
        %v394 = vand.u32 %v393, 4294901760
        %395 = vmatmul.f32.gmra.mxu0 %v394
        %v396 = vpop.f32.mrf.mxu0
        %v397 = vadd.f32 %v370, %v396
        %398 = vdwg.mxu0
        %399 = vmatpush.msra.mxu0 0.0
        %400 = vmatpush.msra.mxu0 0.0
        %401 = vmatpush.msra.mxu0 0.0
        %402 = vmatpush.msra.mxu0 0.0
        %403 = vmatpush.msra.mxu0 0.0
        %404 = vmatpush.msra.mxu0 0.0
        %405 = vmatpush.msra.mxu0 0.0
        %406 = vmatpush.msra.mxu0 0.0
        %407 = vmatpush.msra.mxu0 0.0
        %408 = vmatpush.msra.mxu0 0.0
        %409 = vmatpush.msra.mxu0 0.0
        %410 = vmatpush.msra.mxu0 0.0
        %v411 = vand.u32 %v263, 4294901760
        %v412 = vsub.f32 %v263, %v411
        %v413 = vand.u32 %v412, 4294901760
        %414 = vmatpush.msra.mxu0 %v413
        %v415 = vand.u32 %v262, 4294901760
        %v416 = vsub.f32 %v262, %v415
        %v417 = vand.u32 %v416, 4294901760
        %418 = vmatpush.msra.mxu0 %v417
        %v419 = vand.u32 %v261, 4294901760
        %v420 = vsub.f32 %v261, %v419
        %v421 = vand.u32 %v420, 4294901760
        %422 = vmatpush.msra.mxu0 %v421
        %v423 = vand.u32 %v260, 4294901760
        %v424 = vsub.f32 %v260, %v423
        %v425 = vand.u32 %v424, 4294901760
        %426 = vmatpush.msra.mxu0 %v425
        %v427 = vand.u32 %v270, 4294901760
        %428 = vmatmul.f32.gmra.mxu0 %v427
        %v429 = vpop.f32.mrf.mxu0
        %v430 = vadd.f32 %v397, %v429
        %431 = vdwg.mxu0
        %432 = vmatpush.msra.mxu0 0.0
        %433 = vmatpush.msra.mxu0 0.0
        %434 = vmatpush.msra.mxu0 0.0
        %435 = vmatpush.msra.mxu0 0.0
        %436 = vmatpush.msra.mxu0 0.0
        %437 = vmatpush.msra.mxu0 0.0
        %438 = vmatpush.msra.mxu0 0.0
        %439 = vmatpush.msra.mxu0 0.0
        %440 = vmatpush.msra.mxu0 0.0
        %441 = vmatpush.msra.mxu0 0.0
        %442 = vmatpush.msra.mxu0 0.0
        %443 = vmatpush.msra.mxu0 0.0
        %v444 = vand.u32 %v263, 4294901760
        %445 = vmatpush.msra.mxu0 %v444
        %v446 = vand.u32 %v262, 4294901760
        %447 = vmatpush.msra.mxu0 %v446
        %v448 = vand.u32 %v261, 4294901760
        %449 = vmatpush.msra.mxu0 %v448
        %v450 = vand.u32 %v260, 4294901760
        %451 = vmatpush.msra.mxu0 %v450
        %v452 = vand.u32 %v270, 4294901760
        %453 = vmatmul.f32.gmra.mxu0 %v452
        %v454 = vpop.f32.mrf.mxu0
        %v455 = vadd.f32 %v430, %v454
        %456 = vdwg.mxu0
        %v457 = vmul.f32 %v455, 0.5
        %v458 = vmul.f32 %v455, 0.70710677
        %v459 = vmul.f32 %v458, %v458
        %v460 = vmin.f32 16.0, %v459
        %v461 = vmul.f32 %v460, 2.1237322e-06
        %v462 = vadd.f32 %v461, 0.00028619796
        %v463 = vmul.f32 %v460, %v462
        %v464 = vadd.f32 %v463, 0.0036580483
        %v465 = vmul.f32 %v460, %v464
        %v466 = vadd.f32 %v465, 0.05243302
        %v467 = vmul.f32 %v460, %v466
        %v468 = vadd.f32 %v467, 0.18741608
        %v469 = vmul.f32 %v460, %v468
        %v470 = vadd.f32 %v469, 1.1283791
        %v471 = vmul.f32 %v458, %v470
        %v472 = vmul.f32 %v460, 3.8918573e-05
        %v473 = vadd.f32 %v472, 0.001143296
        %v474 = vmul.f32 %v460, %v473
        %v475 = vadd.f32 %v474, 0.014752088
        %v476 = vmul.f32 %v460, %v475
        %v477 = vadd.f32 %v476, 0.112945676
        %v478 = vmul.f32 %v460, %v477
        %v479 = vadd.f32 %v478, 0.4994258
        %v480 = vmul.f32 %v460, %v479
        %v481 = vadd.f32 %v480, 1.0
        %v482 = vrcp.pop %v481
        %v483 = vmul.f32 %v481, %v482
        %v484 = vsub.f32 1.0, %v483
        %v485 = vmul.f32 %v482, %v484
        %v486 = vadd.f32 %v482, %v485
        %vm487 = vweird.f32 %v481
        %vm488 = vweird.f32 %v482
        %vm489 = vmor %vm487, %vm488
        %v490 = vsel %vm489, %v482, %v486
        %v491 = vand.u32 2147483647, %v481
        %vm492 = vcmp.eq.f32.partialorder %v491, 8.507059e+37
        %v493 = vand.u32 %v481, 2147483648
        %v494 = vor.u32 1.1754944e-38, %v493
        %v495 = vsel %vm492, %v494, %v490
        %v496 = vmul.f32 %v471, %v495
        %v497 = vmin.f32 %v496, 1.0
        %v498 = vmax.f32 %v497, -1.0
        %v499 = vadd.f32 %v498, 1.0
        %v500 = vmul.f32 %v457, %v499
        %v501 = vsel %vm268, %v500, 0.0
        %502 = vadd.xlane.f32.xlu0 %v501
        %v503 = vpop.xlane.xlu0 %502
        %v504 = vmul.f32 %v503, 0.03125
        %v505 = vsub.f32 %v500, %v504
        %v506 = vmul.f32 %v505, %v505
        %v507 = vsel %vm268, %v506, 0.0
        %508 = vadd.xlane.f32.xlu0 %v507
        %v509 = vpop.xlane.xlu0 %508
        %v510 = vmul.f32 %v509, 0.03125
        %v511 = vadd.f32 %v510, 1e-05
        %v512 = vrsqrt.pop %v511
        %v513 = vmul.f32 %v512, %v511
        %v514 = vmul.f32 %v513, %v512
        %v515 = vmul.f32 0.5, %v514
        %v516 = vsub.f32 1.5, %v515
        %v517 = vmul.f32 %v512, %v516
        %vm518 = vweird.f32 %v511
        %vm519 = vweird.f32 %v512
        %vm520 = vmor %vm518, %vm519
        %v521 = vsel %vm520, %v512, %v517
        %v522 = vmul.f32 %v505, %v521
        %v523 = vld [vmem:[%s3] sm:$0x1]
        %v525 = vperm.slane %v523, 0
        %v527 = vmul.f32 %v522, %v525
        %v528 = vld [vmem:[%s4] sm:$0x1]
        %v530 = vperm.slane %v528, 0
        %v532 = vadd.f32 %v527, %v530
        %533 = vst.msk [vmem:[%s258] sm:$0xff] %vm268, %v532
        %s534 = sand.u32 %s141, 1
        %s535 = scalar_lea.sflag [#allocation4], %s534
        %s536 = sand.u32 %s141, 1
        %s537 = smul.addr %s536, 8
        %s538 = scalar_lea.vmem [#allocation7], %s537
        // Predicated region
        $region49: #{tpu_custom_call.1} parent=39 // pred_check
          %p539 = pneg %p151
        $region50: #{tpu_custom_call.1} parent=39 // pred_check_branch
          %541 = sbr.rel (%p539) target = $region52
        $region51: #{tpu_custom_call.1} parent=39 // pred_region
          %543 = vsyncadd %s535, 0
          %s544 = smul.addr %s23, 8
          %s545 = scalar_lea.hbm %s5, %s544
          %s547 = sshll.u32 %s538, 4
          %s548 = int_to_ptr.vmem [resolvable:$true] %s547
          %s549 = sshll.u32 %s545, 4
          %s550 = int_to_ptr.hbm [resolvable:$true] %s549
          %552 = dma.vmem_to_hbm [thread:$0]  %s548, 128, %s550, %s535
        $region52: #{tpu_custom_call.1} parent=39 // pred_fallthru
          _
      $region40: #{tpu_custom_call.1} parent=5 // pred_fallthru
        _
      %p553 = scmp.le.s32.totalorder 2, %s18
      // Predicated region
      $region53: #{tpu_custom_call.1} parent=5 // pred_check
        %p554 = pneg %p553
      $region54: #{tpu_custom_call.1} parent=5 // pred_check_branch
        %556 = sbr.rel (%p554) target = $region56
      $region55: #{tpu_custom_call.1} parent=5 // pred_region
        %s557 = ssub.s32 %s18, 2
        // Predicated region
        $region57: #{tpu_custom_call.1} parent=55 // pred_check
          %p558 = pneg %p157
        $region58: #{tpu_custom_call.1} parent=55 // pred_check_branch
          %560 = sbr.rel (%p558) target = $region60
        $region59: #{tpu_custom_call.1} parent=55 // pred_region
          %s561 = sand.u32 %s142, 1
          %s562 = scalar_lea.sflag [#allocation4], %s561
          %s563 = sand.u32 %s142, 1
          %s564 = smul.addr %s563, 8
          %s565 = scalar_lea.vmem [#allocation7], %s564
          %567 = dma.done %s562, 128
        $region60: #{tpu_custom_call.1} parent=55 // pred_fallthru
          _
      $region56: #{tpu_custom_call.1} parent=5 // pred_fallthru
        _
    $region6: #{tpu_custom_call.1} parent=1 // loop_footer
      %s22 = sadd.s32 1, %s18
    $region7: #{tpu_custom_call.1} parent=1 // loop_footer_branch
      %17 = sbr.rel target = $region3
    $region8: #{tpu_custom_call.1} parent=1 // loop_exit
      _
    %568 = vsyncpa [#allocation3], 1
    %s569 = scalar_lea.sflag [#allocation3], 1
    %570 = vsyncpa %s569, 1
    %571 = vsyncpa [#allocation6], 1
    %572 = vsyncpa [#allocation4], 1
    %s573 = scalar_lea.sflag [#allocation4], 1
    %574 = vsyncpa %s573, 1

// kernel: tpu_custom_call.1
$region0: #{tpu_custom_call.1}
  #allocation0 [shape = 'u32[]', space=smem, size = 0x4, offset = 0x4, fixed_abs, tag = 'smem constant byte address 0x4 - core index']
  #allocation1 [shape = 'u32[72,128]{1,0:T(1,128)}', space=vmem, size = 0x9000, scoped, tag = 'internal scratch']
  %s0 = inlined_call_operand.hbm [shape: f32[16,32], index: 0, kind: input, shape index: {}]
  %s1 = inlined_call_operand.hbm [shape: f32[32,32], index: 1, kind: input, shape index: {}]
  %s2 = inlined_call_operand.vmem [shape: f32[1,32], index: 2, kind: input, shape index: {}]
  %s3 = inlined_call_operand.vmem [shape: f32[1,32], index: 3, kind: input, shape index: {}]
  %s4 = inlined_call_operand.vmem [shape: f32[1,32], index: 4, kind: input, shape index: {}]
  %s5 = inlined_call_operand.hbm [shape: f32[16,32], index: 5, kind: output, shape index: {}]
  %s6 = sld [smem:[#allocation0]]
  $region61: #{tpu_custom_call.1} parent=0
    _
  %s8 = ssub.s32 1, %s6
  %s9 = scalar_select 0, %s8, %s6
  $region1: #{tpu_custom_call.1} parent=0
    #allocation2 [shape = 'u8[8192]{0}', space=vmem, size = 0x2000, scoped, tag = 'input window, operand 0']
    #allocation3 [shape = 's32[2]{0}', space=sflag, size = 0x8, scoped, tag = 'scoped memory for tpu_custom_call.1']
    #allocation4 [shape = 's32[2]{0}', space=sflag, size = 0x8, scoped, tag = 'scoped memory for tpu_custom_call.1']
    #allocation5 [shape = 'u8[16384]{0}', space=vmem, size = 0x4000, scoped, tag = 'input window, operand 1, single buffered']
    #allocation6 [shape = 's32[1]{0}', space=sflag, size = 0x4, scoped, tag = 'scoped memory for tpu_custom_call.1']
    #allocation7 [shape = 'u8[8192]{0}', space=vmem, size = 0x2000, scoped, tag = 'output window, operand 0']
    %10 = vsyncpa [#allocation3], 0
    %s11 = scalar_lea.sflag [#allocation3], 1
    %12 = vsyncpa %s11, 0
    %13 = vsyncpa [#allocation6], 0
    %14 = vsyncpa [#allocation4], 0
    %s15 = scalar_lea.sflag [#allocation4], 1
    %16 = vsyncpa %s15, 0
    loop: start=0, step=1, limit=4
    $region2: #{tpu_custom_call.1} parent=1 // loop_pre_header
      _
    $region3: #{tpu_custom_call.1} parent=1 // loop_header
      %s18 = sphi 0, %s22
      %p19 = scmp.ge.s32.totalorder %s18, 4
      %s28 = sphi 0, %s30
      %s31 = sphi 0, %s28
      %s32 = sphi 0, %s31
      %s48 = sphi 0, %s32
      %s52 = sphi 0, %s52
      %s54 = sphi 0, %s52
      %s55 = sphi 0, %s54
      %s69 = sphi 0, %s55
      %s73 = sphi 0, %s73
      %s75 = sphi 0, %s73
      %s76 = sphi 0, %s75
      %s90 = sphi 0, %s76
      %s94 = sphi 0, %s94
      %s96 = sphi 0, %s94
      %s97 = sphi 0, %s96
      %s111 = sphi 0, %s97
      %s115 = sphi 0, %s115
      %s117 = sphi 0, %s115
      %s118 = sphi 0, %s117
      %s132 = sphi 0, %s118
      %s138 = sphi 0, %s140
      %s141 = sphi 0, %s138
      %s142 = sphi 0, %s141
      %s158 = sphi 0, %s142
    $region4: #{tpu_custom_call.1} parent=1 // loop_header_branch
      %21 = sbr.rel (%p19) target = $region8
    $region5: #{tpu_custom_call.1} parent=1 // loop_body
      %s23 = ssub.s32 %s18, 1
      %s24 = ssub.s32 %s18, 2
      %s25 = sadd.s32 %s18, 1
      %s26 = ssub.s32 %s18, %s25
      %p27 = scmp.eq.s32.totalorder %s26, 0
      %s29 = sadd.s32 %s28, 1
      %s30 = scalar_select %p27, %s28, %s29
      %p33 = pneg %p27
      %p34 = scmp.eq.s32.totalorder %s18, 1
      %p35 = por %p33, %p34
      %p36 = scmp.ne.s32.totalorder %s28, %s31
      %p37 = scmp.eq.s32.totalorder %s18, 0
      %p38 = por %p36, %p37
      %p39 = scmp.ne.s32.totalorder %s28, %s31
      %p40 = scmp.eq.s32.totalorder %s23, 1
      %p41 = por %p39, %p40
      %p42 = scmp.ne.s32.totalorder %s31, %s32
      %p43 = scmp.eq.s32.totalorder %s23, 0
      %p44 = por %p42, %p43
      %p45 = scmp.ne.s32.totalorder %s31, %s32
      %p46 = scmp.eq.s32.totalorder %s24, 1
      %p47 = por %p45, %p46
      %p49 = scmp.ne.s32.totalorder %s32, %s48
      %p50 = scmp.eq.s32.totalorder %s24, 0
      %p51 = por %p49, %p50
      %s53 = sadd.s32 %s52, 1
      %p56 = scmp.eq.s32.totalorder %s18, 1
      %p57 = scmp.ne.s32.totalorder %s52, %s54
      %p58 = scmp.eq.s32.totalorder %s18, 0
      %p59 = por %p57, %p58
      %p60 = scmp.ne.s32.totalorder %s52, %s54
      %p61 = scmp.eq.s32.totalorder %s23, 1
      %p62 = por %p60, %p61
      %p63 = scmp.ne.s32.totalorder %s54, %s55
      %p64 = scmp.eq.s32.totalorder %s23, 0
      %p65 = por %p63, %p64
      %p66 = scmp.ne.s32.totalorder %s54, %s55
      %p67 = scmp.eq.s32.totalorder %s24, 1
      %p68 = por %p66, %p67
      %p70 = scmp.ne.s32.totalorder %s55, %s69
      %p71 = scmp.eq.s32.totalorder %s24, 0
      %p72 = por %p70, %p71
      %s74 = sadd.s32 %s73, 1
      %p77 = scmp.eq.s32.totalorder %s18, 1
      %p78 = scmp.ne.s32.totalorder %s73, %s75
      %p79 = scmp.eq.s32.totalorder %s18, 0
      %p80 = por %p78, %p79
      %p81 = scmp.ne.s32.totalorder %s73, %s75
      %p82 = scmp.eq.s32.totalorder %s23, 1
      %p83 = por %p81, %p82
      %p84 = scmp.ne.s32.totalorder %s75, %s76
      %p85 = scmp.eq.s32.totalorder %s23, 0
      %p86 = por %p84, %p85
      %p87 = scmp.ne.s32.totalorder %s75, %s76
      %p88 = scmp.eq.s32.totalorder %s24, 1
      %p89 = por %p87, %p88
      %p91 = scmp.ne.s32.totalorder %s76, %s90
      %p92 = scmp.eq.s32.totalorder %s24, 0
      %p93 = por %p91, %p92
      %s95 = sadd.s32 %s94, 1
      %p98 = scmp.eq.s32.totalorder %s18, 1
      %p99 = scmp.ne.s32.totalorder %s94, %s96
      %p100 = scmp.eq.s32.totalorder %s18, 0
      %p101 = por %p99, %p100
      %p102 = scmp.ne.s32.totalorder %s94, %s96
      %p103 = scmp.eq.s32.totalorder %s23, 1
      %p104 = por %p102, %p103
      %p105 = scmp.ne.s32.totalorder %s96, %s97
      %p106 = scmp.eq.s32.totalorder %s23, 0
      %p107 = por %p105, %p106
      %p108 = scmp.ne.s32.totalorder %s96, %s97
      %p109 = scmp.eq.s32.totalorder %s24, 1
      %p110 = por %p108, %p109
      %p112 = scmp.ne.s32.totalorder %s97, %s111
      %p113 = scmp.eq.s32.totalorder %s24, 0
      %p114 = por %p112, %p113
      %s116 = sadd.s32 %s115, 1
      %p119 = scmp.eq.s32.totalorder %s18, 1
      %p120 = scmp.ne.s32.totalorder %s115, %s117
      %p121 = scmp.eq.s32.totalorder %s18, 0
      %p122 = por %p120, %p121
      %p123 = scmp.ne.s32.totalorder %s115, %s117
      %p124 = scmp.eq.s32.totalorder %s23, 1
      %p125 = por %p123, %p124
      %p126 = scmp.ne.s32.totalorder %s117, %s118
      %p127 = scmp.eq.s32.totalorder %s23, 0
      %p128 = por %p126, %p127
      %p129 = scmp.ne.s32.totalorder %s117, %s118
      %p130 = scmp.eq.s32.totalorder %s24, 1
      %p131 = por %p129, %p130
      %p133 = scmp.ne.s32.totalorder %s118, %s132
      %p134 = scmp.eq.s32.totalorder %s24, 0
      %p135 = por %p133, %p134
      %s136 = ssub.s32 %s18, %s25
      %p137 = scmp.eq.s32.totalorder %s136, 0
      %s139 = sadd.s32 %s138, 1
      %s140 = scalar_select %p137, %s138, %s139
      %p143 = pneg %p137
      %p144 = scmp.eq.s32.totalorder %s18, 1
      %p145 = por %p143, %p144
      %p146 = scmp.ne.s32.totalorder %s138, %s141
      %p147 = scmp.eq.s32.totalorder %s18, 0
      %p148 = por %p146, %p147
      %p149 = scmp.ne.s32.totalorder %s138, %s141
      %p150 = scmp.eq.s32.totalorder %s23, 1
      %p151 = por %p149, %p150
      %p152 = scmp.ne.s32.totalorder %s141, %s142
      %p153 = scmp.eq.s32.totalorder %s23, 0
      %p154 = por %p152, %p153
      %p155 = scmp.ne.s32.totalorder %s141, %s142
      %p156 = scmp.eq.s32.totalorder %s24, 1
      %p157 = por %p155, %p156
      %p159 = scmp.ne.s32.totalorder %s142, %s158
      %p160 = scmp.eq.s32.totalorder %s24, 0
      %p161 = por %p159, %p160
      %p162 = scmp.le.s32.totalorder 1, %s18
      %p163 = scmp.lt.s32.totalorder %s18, 3
      %p164 = pnand %p162, %p163
      %p165 = pneg %p164
      // Predicated region
      $region9: #{tpu_custom_call.1} parent=5 // pred_check
        _
      $region10: #{tpu_custom_call.1} parent=5 // pred_check_branch
        %167 = sbr.rel (%p164) target = $region12
      $region11: #{tpu_custom_call.1} parent=5 // pred_region
        %s168 = ssub.s32 %s18, 1
        // Predicated region
        $region13: #{tpu_custom_call.1} parent=11 // pred_check
          %p169 = pneg %p65
        $region14: #{tpu_custom_call.1} parent=11 // pred_check_branch
          %171 = sbr.rel (%p169) target = $region16
        $region15: #{tpu_custom_call.1} parent=11 // pred_region
          %173 = vsyncadd [#allocation6], 0
          %s174 = sshll.u32 %s1, 4
          %s175 = int_to_ptr.hbm [resolvable:$true] %s174
          %s176 = sshll.u32 [#allocation5], 4
          %s177 = int_to_ptr.vmem [resolvable:$true] %s176
          %182 = dma.hbm_to_vmem [thread:$0]  %s175, 512, %s177, [#allocation6], 128, 128, 8
        $region16: #{tpu_custom_call.1} parent=11 // pred_fallthru
          _
        // Predicated region
        $region17: #{tpu_custom_call.1} parent=11 // pred_check
          %p183 = pneg %p86
        $region18: #{tpu_custom_call.1} parent=11 // pred_check_branch
          %185 = sbr.rel (%p183) target = $region20
        $region19: #{tpu_custom_call.1} parent=11 // pred_region
          _
        $region20: #{tpu_custom_call.1} parent=11 // pred_fallthru
          _
        // Predicated region
        $region21: #{tpu_custom_call.1} parent=11 // pred_check
          %p186 = pneg %p107
        $region22: #{tpu_custom_call.1} parent=11 // pred_check_branch
          %188 = sbr.rel (%p186) target = $region24
        $region23: #{tpu_custom_call.1} parent=11 // pred_region
          _
        $region24: #{tpu_custom_call.1} parent=11 // pred_fallthru
          _
        // Predicated region
        $region25: #{tpu_custom_call.1} parent=11 // pred_check
          %p189 = pneg %p128
        $region26: #{tpu_custom_call.1} parent=11 // pred_check_branch
          %191 = sbr.rel (%p189) target = $region28
        $region27: #{tpu_custom_call.1} parent=11 // pred_region
          _
        $region28: #{tpu_custom_call.1} parent=11 // pred_fallthru
          _
      $region12: #{tpu_custom_call.1} parent=5 // pred_fallthru
        _
      %p192 = scmp.lt.s32.totalorder %s18, 2
      // Predicated region
      $region29: #{tpu_custom_call.1} parent=5 // pred_check
        %p193 = pneg %p192
      $region30: #{tpu_custom_call.1} parent=5 // pred_check_branch
        %195 = sbr.rel (%p193) target = $region32
      $region31: #{tpu_custom_call.1} parent=5 // pred_region
        // Predicated region
        $region33: #{tpu_custom_call.1} parent=31 // pred_check
          %p196 = pneg %p38
        $region34: #{tpu_custom_call.1} parent=31 // pred_check_branch
          %198 = sbr.rel (%p196) target = $region36
        $region35: #{tpu_custom_call.1} parent=31 // pred_region
          %s199 = sand.u32 %s28, 1
          %s200 = scalar_lea.sflag [#allocation3], %s199
          %s201 = sand.u32 %s28, 1
          %s202 = smul.addr %s201, 8
          %s203 = scalar_lea.vmem [#allocation2], %s202
          %205 = vsyncadd %s200, 0
          %s206 = smul.addr %s18, 8
          %s207 = scalar_lea.hbm %s0, %s206
          %s209 = sshll.u32 %s207, 4
          %s210 = int_to_ptr.hbm [resolvable:$true] %s209
          %s211 = sshll.u32 %s203, 4
          %s212 = int_to_ptr.vmem [resolvable:$true] %s211
          %214 = dma.hbm_to_vmem [thread:$0]  %s210, 128, %s212, %s200
        $region36: #{tpu_custom_call.1} parent=31 // pred_fallthru
          _
      $region32: #{tpu_custom_call.1} parent=5 // pred_fallthru
        _
      %p215 = scmp.le.s32.totalorder 1, %s18
      %p216 = scmp.lt.s32.totalorder %s18, 3
      %p217 = pnand %p215, %p216
      %p218 = pneg %p217
      // Predicated region
      $region37: #{tpu_custom_call.1} parent=5 // pred_check
        _
      $region38: #{tpu_custom_call.1} parent=5 // pred_check_branch
        %220 = sbr.rel (%p217) target = $region40
      $region39: #{tpu_custom_call.1} parent=5 // pred_region
        %s221 = ssub.s32 %s18, 1
        %s222 = sand.u32 %s31, 1
        %s223 = scalar_lea.sflag [#allocation3], %s222
        %s224 = sand.u32 %s31, 1
        %s225 = smul.addr %s224, 8
        %s226 = scalar_lea.vmem [#allocation2], %s225
        // Predicated region
        $region41: #{tpu_custom_call.1} parent=39 // pred_check
          %p227 = pneg %p44
        $region42: #{tpu_custom_call.1} parent=39 // pred_check_branch
          %229 = sbr.rel (%p227) target = $region44
        $region43: #{tpu_custom_call.1} parent=39 // pred_region
          %231 = dma.done %s223, 128
        $region44: #{tpu_custom_call.1} parent=39 // pred_fallthru
          _
        // Predicated region
        $region45: #{tpu_custom_call.1} parent=39 // pred_check
          %p232 = pneg %p65
        $region46: #{tpu_custom_call.1} parent=39 // pred_check_branch
          %234 = sbr.rel (%p232) target = $region48
        $region47: #{tpu_custom_call.1} parent=39 // pred_region
          %236 = dma.done [#allocation6], 512
        $region48: #{tpu_custom_call.1} parent=39 // pred_fallthru
          _
        %s237 = sand.u32 %s31, 1
        %s238 = scalar_lea.sflag [#allocation3], %s237
        %s239 = sand.u32 %s31, 1
        %s240 = smul.addr %s239, 8
        %s241 = scalar_lea.vmem [#allocation2], %s240
        %p242 = pneg %p44
        %p243 = pneg %p41
        %p244 = pneg %p65
        %p245 = pneg %p62
        %p246 = pneg %p86
        %p247 = pneg %p83
        %p248 = pneg %p107
        %p249 = pneg %p104
        %p250 = pneg %p128
        %p251 = pneg %p125
        %p252 = pneg %p154
        %p253 = pneg %p151
        %s254 = sand.u32 %s141, 1
        %s255 = scalar_lea.sflag [#allocation4], %s254
        %s256 = sand.u32 %s141, 1
        %s257 = smul.addr %s256, 8
        %s258 = scalar_lea.vmem [#allocation7], %s257
        %v259 = vld [vmem:[%s226] sm:$0xff]
        %v260 = vld [vmem:[#allocation5] sm:$0xff]
        %v261 = vld [vmem:[#allocation5 + $0x8] sm:$0xff]
        %v262 = vld [vmem:[#allocation5 + $0x10] sm:$0xff]
        %v263 = vld [vmem:[#allocation5 + $0x18] sm:$0xff]
        %v264 = vld [vmem:[%s2] sm:$0x1]
        %v266 = vperm.slane %v264, 0
        %vm268 = vcmask 261120
        %v270 = vsel %vm268, %v259, 0
        %272 = vmatpush.msra.mxu0 0.0
        %273 = vmatpush.msra.mxu0 0.0
        %274 = vmatpush.msra.mxu0 0.0
        %275 = vmatpush.msra.mxu0 0.0
        %276 = vmatpush.msra.mxu0 0.0
        %277 = vmatpush.msra.mxu0 0.0
        %278 = vmatpush.msra.mxu0 0.0
        %279 = vmatpush.msra.mxu0 0.0
        %280 = vmatpush.msra.mxu0 0.0
        %281 = vmatpush.msra.mxu0 0.0
        %282 = vmatpush.msra.mxu0 0.0
        %283 = vmatpush.msra.mxu0 0.0
        %v284 = vand.u32 %v263, 4294901760
        %285 = vmatpush.msra.mxu0 %v284
        %v286 = vand.u32 %v262, 4294901760
        %287 = vmatpush.msra.mxu0 %v286
        %v288 = vand.u32 %v261, 4294901760
        %289 = vmatpush.msra.mxu0 %v288
        %v290 = vand.u32 %v260, 4294901760
        %291 = vmatpush.msra.mxu0 %v290
        %v292 = vand.u32 %v270, 4294901760
        %v293 = vsub.f32 %v270, %v292
        %v294 = vand.u32 %v293, 4294901760
        %v295 = vsub.f32 %v293, %v294
        %v296 = vand.u32 %v295, 4294901760
        %297 = vmatmul.f32.gmra.mxu0 %v296
        %v298 = vpop.f32.mrf.mxu0
        %v299 = vadd.f32 %v266, %v298
        %300 = vdwg.mxu0
        %301 = vmatpush.msra.mxu0 0.0
        %302 = vmatpush.msra.mxu0 0.0
        %303 = vmatpush.msra.mxu0 0.0
        %304 = vmatpush.msra.mxu0 0.0
        %305 = vmatpush.msra.mxu0 0.0
        %306 = vmatpush.msra.mxu0 0.0
        %307 = vmatpush.msra.mxu0 0.0
        %308 = vmatpush.msra.mxu0 0.0
        %309 = vmatpush.msra.mxu0 0.0
        %310 = vmatpush.msra.mxu0 0.0
        %311 = vmatpush.msra.mxu0 0.0
        %312 = vmatpush.msra.mxu0 0.0
        %v313 = vand.u32 %v263, 4294901760
        %v314 = vsub.f32 %v263, %v313
        %v315 = vand.u32 %v314, 4294901760
        %v316 = vsub.f32 %v314, %v315
        %v317 = vand.u32 %v316, 4294901760
        %318 = vmatpush.msra.mxu0 %v317
        %v319 = vand.u32 %v262, 4294901760
        %v320 = vsub.f32 %v262, %v319
        %v321 = vand.u32 %v320, 4294901760
        %v322 = vsub.f32 %v320, %v321
        %v323 = vand.u32 %v322, 4294901760
        %324 = vmatpush.msra.mxu0 %v323
        %v325 = vand.u32 %v261, 4294901760
        %v326 = vsub.f32 %v261, %v325
        %v327 = vand.u32 %v326, 4294901760
        %v328 = vsub.f32 %v326, %v327
        %v329 = vand.u32 %v328, 4294901760
        %330 = vmatpush.msra.mxu0 %v329
        %v331 = vand.u32 %v260, 4294901760
        %v332 = vsub.f32 %v260, %v331
        %v333 = vand.u32 %v332, 4294901760
        %v334 = vsub.f32 %v332, %v333
        %v335 = vand.u32 %v334, 4294901760
        %336 = vmatpush.msra.mxu0 %v335
        %v337 = vand.u32 %v270, 4294901760
        %338 = vmatmul.f32.gmra.mxu0 %v337
        %v339 = vpop.f32.mrf.mxu0
        %v340 = vadd.f32 %v299, %v339
        %341 = vdwg.mxu0
        %342 = vmatpush.msra.mxu0 0.0
        %343 = vmatpush.msra.mxu0 0.0
        %344 = vmatpush.msra.mxu0 0.0
        %345 = vmatpush.msra.mxu0 0.0
        %346 = vmatpush.msra.mxu0 0.0
        %347 = vmatpush.msra.mxu0 0.0
        %348 = vmatpush.msra.mxu0 0.0
        %349 = vmatpush.msra.mxu0 0.0
        %350 = vmatpush.msra.mxu0 0.0
        %351 = vmatpush.msra.mxu0 0.0
        %352 = vmatpush.msra.mxu0 0.0
        %353 = vmatpush.msra.mxu0 0.0
        %v354 = vand.u32 %v263, 4294901760
        %v355 = vsub.f32 %v263, %v354
        %356 = vmatpush.msra.mxu0 %v355
        %v357 = vand.u32 %v262, 4294901760
        %v358 = vsub.f32 %v262, %v357
        %359 = vmatpush.msra.mxu0 %v358
        %v360 = vand.u32 %v261, 4294901760
        %v361 = vsub.f32 %v261, %v360
        %362 = vmatpush.msra.mxu0 %v361
        %v363 = vand.u32 %v260, 4294901760
        %v364 = vsub.f32 %v260, %v363
        %365 = vmatpush.msra.mxu0 %v364
        %v366 = vand.u32 %v270, 4294901760
        %v367 = vsub.f32 %v270, %v366
        %368 = vmatmul.f32.gmra.mxu0 %v367
        %v369 = vpop.f32.mrf.mxu0
        %v370 = vadd.f32 %v340, %v369
        %371 = vdwg.mxu0
        %372 = vmatpush.msra.mxu0 0.0
        %373 = vmatpush.msra.mxu0 0.0
        %374 = vmatpush.msra.mxu0 0.0
        %375 = vmatpush.msra.mxu0 0.0
        %376 = vmatpush.msra.mxu0 0.0
        %377 = vmatpush.msra.mxu0 0.0
        %378 = vmatpush.msra.mxu0 0.0
        %379 = vmatpush.msra.mxu0 0.0
        %380 = vmatpush.msra.mxu0 0.0
        %381 = vmatpush.msra.mxu0 0.0
        %382 = vmatpush.msra.mxu0 0.0
        %383 = vmatpush.msra.mxu0 0.0
        %v384 = vand.u32 %v263, 4294901760
        %385 = vmatpush.msra.mxu0 %v384
        %v386 = vand.u32 %v262, 4294901760
        %387 = vmatpush.msra.mxu0 %v386
        %v388 = vand.u32 %v261, 4294901760
        %389 = vmatpush.msra.mxu0 %v388
        %v390 = vand.u32 %v260, 4294901760
        %391 = vmatpush.msra.mxu0 %v390
        %v392 = vand.u32 %v270, 4294901760
        %v393 = vsub.f32 %v270, %v392
        %v394 = vand.u32 %v393, 4294901760
        %395 = vmatmul.f32.gmra.mxu0 %v394
        %v396 = vpop.f32.mrf.mxu0
        %v397 = vadd.f32 %v370, %v396
        %398 = vdwg.mxu0
        %399 = vmatpush.msra.mxu0 0.0
        %400 = vmatpush.msra.mxu0 0.0
        %401 = vmatpush.msra.mxu0 0.0
        %402 = vmatpush.msra.mxu0 0.0
        %403 = vmatpush.msra.mxu0 0.0
        %404 = vmatpush.msra.mxu0 0.0
        %405 = vmatpush.msra.mxu0 0.0
        %406 = vmatpush.msra.mxu0 0.0
        %407 = vmatpush.msra.mxu0 0.0
        %408 = vmatpush.msra.mxu0 0.0
        %409 = vmatpush.msra.mxu0 0.0
        %410 = vmatpush.msra.mxu0 0.0
        %v411 = vand.u32 %v263, 4294901760
        %v412 = vsub.f32 %v263, %v411
        %v413 = vand.u32 %v412, 4294901760
        %414 = vmatpush.msra.mxu0 %v413
        %v415 = vand.u32 %v262, 4294901760
        %v416 = vsub.f32 %v262, %v415
        %v417 = vand.u32 %v416, 4294901760
        %418 = vmatpush.msra.mxu0 %v417
        %v419 = vand.u32 %v261, 4294901760
        %v420 = vsub.f32 %v261, %v419
        %v421 = vand.u32 %v420, 4294901760
        %422 = vmatpush.msra.mxu0 %v421
        %v423 = vand.u32 %v260, 4294901760
        %v424 = vsub.f32 %v260, %v423
        %v425 = vand.u32 %v424, 4294901760
        %426 = vmatpush.msra.mxu0 %v425
        %v427 = vand.u32 %v270, 4294901760
        %428 = vmatmul.f32.gmra.mxu0 %v427
        %v429 = vpop.f32.mrf.mxu0
        %v430 = vadd.f32 %v397, %v429
        %431 = vdwg.mxu0
        %432 = vmatpush.msra.mxu0 0.0
        %433 = vmatpush.msra.mxu0 0.0
        %434 = vmatpush.msra.mxu0 0.0
        %435 = vmatpush.msra.mxu0 0.0
        %436 = vmatpush.msra.mxu0 0.0
        %437 = vmatpush.msra.mxu0 0.0
        %438 = vmatpush.msra.mxu0 0.0
        %439 = vmatpush.msra.mxu0 0.0
        %440 = vmatpush.msra.mxu0 0.0
        %441 = vmatpush.msra.mxu0 0.0
        %442 = vmatpush.msra.mxu0 0.0
        %443 = vmatpush.msra.mxu0 0.0
        %v444 = vand.u32 %v263, 4294901760
        %445 = vmatpush.msra.mxu0 %v444
        %v446 = vand.u32 %v262, 4294901760
        %447 = vmatpush.msra.mxu0 %v446
        %v448 = vand.u32 %v261, 4294901760
        %449 = vmatpush.msra.mxu0 %v448
        %v450 = vand.u32 %v260, 4294901760
        %451 = vmatpush.msra.mxu0 %v450
        %v452 = vand.u32 %v270, 4294901760
        %453 = vmatmul.f32.gmra.mxu0 %v452
        %v454 = vpop.f32.mrf.mxu0
        %v455 = vadd.f32 %v430, %v454
        %456 = vdwg.mxu0
        %v457 = vmul.f32 %v455, 0.5
        %v458 = vmul.f32 %v455, 0.70710677
        %v459 = vmul.f32 %v458, %v458
        %v460 = vmin.f32 16.0, %v459
        %v461 = vmul.f32 %v460, 2.1237322e-06
        %v462 = vadd.f32 %v461, 0.00028619796
        %v463 = vmul.f32 %v460, %v462
        %v464 = vadd.f32 %v463, 0.0036580483
        %v465 = vmul.f32 %v460, %v464
        %v466 = vadd.f32 %v465, 0.05243302
        %v467 = vmul.f32 %v460, %v466
        %v468 = vadd.f32 %v467, 0.18741608
        %v469 = vmul.f32 %v460, %v468
        %v470 = vadd.f32 %v469, 1.1283791
        %v471 = vmul.f32 %v458, %v470
        %v472 = vmul.f32 %v460, 3.8918573e-05
        %v473 = vadd.f32 %v472, 0.001143296
        %v474 = vmul.f32 %v460, %v473
        %v475 = vadd.f32 %v474, 0.014752088
        %v476 = vmul.f32 %v460, %v475
        %v477 = vadd.f32 %v476, 0.112945676
        %v478 = vmul.f32 %v460, %v477
        %v479 = vadd.f32 %v478, 0.4994258
        %v480 = vmul.f32 %v460, %v479
        %v481 = vadd.f32 %v480, 1.0
        %v482 = vrcp.pop %v481
        %v483 = vmul.f32 %v481, %v482
        %v484 = vsub.f32 1.0, %v483
        %v485 = vmul.f32 %v482, %v484
        %v486 = vadd.f32 %v482, %v485
        %vm487 = vweird.f32 %v481
        %vm488 = vweird.f32 %v482
        %vm489 = vmor %vm487, %vm488
        %v490 = vsel %vm489, %v482, %v486
        %v491 = vand.u32 2147483647, %v481
        %vm492 = vcmp.eq.f32.partialorder %v491, 8.507059e+37
        %v493 = vand.u32 %v481, 2147483648
        %v494 = vor.u32 1.1754944e-38, %v493
        %v495 = vsel %vm492, %v494, %v490
        %v496 = vmul.f32 %v471, %v495
        %v497 = vmin.f32 %v496, 1.0
        %v498 = vmax.f32 %v497, -1.0
        %v499 = vadd.f32 %v498, 1.0
        %v500 = vmul.f32 %v457, %v499
        %v501 = vsel %vm268, %v500, 0.0
        %502 = vadd.xlane.f32.xlu0 %v501
        %v503 = vpop.xlane.xlu0 %502
        %v504 = vmul.f32 %v503, 0.03125
        %v505 = vsub.f32 %v500, %v504
        %v506 = vmul.f32 %v505, %v505
        %v507 = vsel %vm268, %v506, 0.0
        %508 = vadd.xlane.f32.xlu0 %v507
        %v509 = vpop.xlane.xlu0 %508
        %v510 = vmul.f32 %v509, 0.03125
        %v511 = vadd.f32 %v510, 1e-05
        %v512 = vrsqrt.pop %v511
        %v513 = vmul.f32 %v512, %v511
        %v514 = vmul.f32 %v513, %v512
        %v515 = vmul.f32 0.5, %v514
        %v516 = vsub.f32 1.5, %v515
        %v517 = vmul.f32 %v512, %v516
        %vm518 = vweird.f32 %v511
        %vm519 = vweird.f32 %v512
        %vm520 = vmor %vm518, %vm519
        %v521 = vsel %vm520, %v512, %v517
        %v522 = vmul.f32 %v505, %v521
        %v523 = vld [vmem:[%s3] sm:$0x1]
        %v525 = vperm.slane %v523, 0
        %v527 = vmul.f32 %v522, %v525
        %v528 = vld [vmem:[%s4] sm:$0x1]
        %v530 = vperm.slane %v528, 0
        %v532 = vadd.f32 %v527, %v530
        %533 = vst.msk [vmem:[%s258] sm:$0xff] %vm268, %v532
        %s534 = sand.u32 %s141, 1
        %s535 = scalar_lea.sflag [#allocation4], %s534
        %s536 = sand.u32 %s141, 1
        %s537 = smul.addr %s536, 8
        %s538 = scalar_lea.vmem [#allocation7], %s537
        // Predicated region
        $region49: #{tpu_custom_call.1} parent=39 // pred_check
          %p539 = pneg %p151
        $region50: #{tpu_custom_call.1} parent=39 // pred_check_branch
          %541 = sbr.rel (%p539) target = $region52
        $region51: #{tpu_custom_call.1} parent=39 // pred_region
          %543 = vsyncadd %s535, 0
          %s544 = smul.addr %s23, 8
          %s545 = scalar_lea.hbm %s5, %s544
          %s547 = sshll.u32 %s538, 4
          %s548 = int_to_ptr.vmem [resolvable:$true] %s547
          %s549 = sshll.u32 %s545, 4
          %s550 = int_to_ptr.hbm [resolvable:$true] %s549
          %552 = dma.vmem_to_hbm [thread:$0]  %s548, 128, %s550, %s535
        $region52: #{tpu_custom_call.1} parent=39 // pred_fallthru
          _
      $region40: #{tpu_custom_call.1} parent=5 // pred_fallthru
        _
      %p553 = scmp.le.s32.totalorder 2, %s18
      // Predicated region
      $region53: #{tpu_custom_call.1} parent=5 // pred_check
        %p554 = pneg %p553
      $region54: #{tpu_custom_call.1} parent=5 // pred_check_branch
        %556 = sbr.rel (%p554) target = $region56
      $region55: #{tpu_custom_call.1} parent=5 // pred_region
        %s557 = ssub.s32 %s18, 2
        // Predicated region
        $region57: #{tpu_custom_call.1} parent=55 // pred_check
          %p558 = pneg %p157
        $region58: #{tpu_custom_call.1} parent=55 // pred_check_branch
          %560 = sbr.rel (%p558) target = $region60
        $region59: #{tpu_custom_call.1} parent=55 // pred_region
          %s561 = sand.u32 %s142, 1
          %s562 = scalar_lea.sflag [#allocation4], %s561
          %s563 = sand.u32 %s142, 1
          %s564 = smul.addr %s563, 8
          %s565 = scalar_lea.vmem [#allocation7], %s564
          %567 = dma.done %s562, 128
        $region60: #{tpu_custom_call.1} parent=55 // pred_fallthru
          _
      $region56: #{tpu_custom_call.1} parent=5 // pred_fallthru
        _
    $region6: #{tpu_custom_call.1} parent=1 // loop_footer
      %s22 = sadd.s32 1, %s18
    $region7: #{tpu_custom_call.1} parent=1 // loop_footer_branch
      %17 = sbr.rel target = $region3
    $region8: #{tpu_custom_call.1} parent=1 // loop_exit
      _
    %568 = vsyncpa [#allocation3], 1
    %s569 = scalar_lea.sflag [#allocation3], 1
    %570 = vsyncpa %s569, 1
    %571 = vsyncpa [#allocation6], 1
    %572 = vsyncpa [#allocation4], 1
    %s573 = scalar_lea.sflag [#allocation4], 1
    %574 = vsyncpa %s573, 1

</llo_original>
